<compile_context>
chip_gen: v5e
topology: v5e:2x2
jax: 0.10.0
libtpu: 0.0.40
codegen_flags: <defaults>
</compile_context>

<pallas_src>
import functools

import jax
import jax.numpy as jnp
from jax.experimental import pallas as pl
from jax.experimental.pallas import tpu as pltpu


def _round_up(n, m):
    return ((n + m - 1) // m) * m


def _pad_feature(d):
    """Lane-dense feature padding: 128 for small dims, 256 once the real dim is >= 256
    (matches the 256x256 MXU on v6e/v7x; 128 already saturates v5e's 128x128 MXU)."""
    return _round_up(d, 256) if d >= 256 else _round_up(d, 128)


def _choose_tm(B):
    """Batch tile: sublane-packed for tiny B; otherwise prefer >=2 grid tiles (v7x
    megacore sharding) and minimal dead-row padding, then the largest tile."""
    if B < 128:
        return _round_up(max(B, 1), 16)
    best_key, best_tm = None, None
    for tm in (64, 128, 256):
        b_pad = _round_up(B, tm)
        key = (0 if b_pad // tm >= 2 else 1, b_pad - B, -tm)
        if best_key is None or key < best_key:
            best_key, best_tm = key, tm
    return best_tm


def _fused_mlp_kernel(*refs, n_layers):
    # refs = (x_ref, w0, b0, w1, b1, ..., w_{L-1}, b_{L-1}, o_ref)
    x_ref = refs[0]
    o_ref = refs[1 + 2 * n_layers]

    # Activations stay resident in VMEM/vregs across the whole fused layer stack.
    h = x_ref[...]  # bf16 [tm, d0_pad]
    for l in range(n_layers):
        w = refs[1 + 2 * l][...]   # bf16 [d_in_pad, d_out_pad]
        b = refs[2 + 2 * l][...]   # f32  [1, d_out_pad]
        # MXU matmul with f32 accumulation; bias (+ReLU) epilogue in f32 on the VPU.
        y = jnp.dot(h, w, preferred_element_type=jnp.float32) + b
        if l < n_layers - 1:
            h = jnp.maximum(y, 0.0).astype(jnp.bfloat16)
        else:
            o_ref[...] = y.astype(o_ref.dtype)


def prepare_mlp_params(params):
    """One-time param prep (hoisted off the forward critical path): pad every feature
    dim lane-dense, cast weights to bf16 (MXU operands) and biases to f32 (epilogue).

    params: list of (w [in, out], b [out]) float32 arrays.
    Returns (prepared_params, meta).
    """
    dims = [params[0][0].shape[0]] + [w.shape[1] for (w, _) in params]
    dims_p = [_pad_feature(d) for d in dims]
    prepared = []
    for l, (w, b) in enumerate(params):
        d_in, d_out = w.shape
        d_in_p, d_out_p = dims_p[l], dims_p[l + 1]
        # Zero padding is exact under matmul + bias + ReLU (padded cols stay 0).
        w_p = jnp.zeros((d_in_p, d_out_p), jnp.bfloat16).at[:d_in, :d_out].set(
            w.astype(jnp.bfloat16))
        b_p = jnp.zeros((1, d_out_p), jnp.float32).at[0, :d_out].set(
            b.astype(jnp.float32))
        prepared.append((w_p, b_p))
    meta = {"dims": dims, "dims_p": dims_p, "in_dim": dims[0], "out_dim": dims[-1]}
    return prepared, meta


def _vmem_budget_bytes(tm, dims_p, out_itemsize, single_buffer_weights):
    """Estimate the kernel's resident VMEM footprint."""
    n_layers = len(dims_p) - 1
    wb_bufs = 1 if single_buffer_weights else 2
    w_bytes = sum(dims_p[l] * dims_p[l + 1] * 2 for l in range(n_layers))   # bf16
    b_bytes = sum(dims_p[l + 1] * 4 for l in range(n_layers))               # f32
    x_tile = 2 * tm * dims_p[0] * 2               # bf16, double-buffered
    o_tile = 2 * tm * dims_p[-1] * out_itemsize   # double-buffered
    act = tm * max(dims_p) * (2 + 4)              # live bf16 h + f32 y intermediates
    return wb_bufs * (w_bytes + b_bytes) + x_tile + o_tile + act


def _build_specs(tm, dims_p, n_layers, single_buffer_weights):
    in_specs = [pl.BlockSpec((tm, dims_p[0]), lambda i: (i, 0))]
    for l in range(n_layers):
        d_in_p, d_out_p = dims_p[l], dims_p[l + 1]
        if single_buffer_weights:
            # Constant index_map across the batch grid -> no need to double-buffer;
            # single buffering halves the resident weight footprint.
            w_spec = pl.BlockSpec((d_in_p, d_out_p), lambda i: (0, 0),
                                  pipeline_mode=pl.Buffered(1))
            b_spec = pl.BlockSpec((1, d_out_p), lambda i: (0, 0),
                                  pipeline_mode=pl.Buffered(1))
        else:
            w_spec = pl.BlockSpec((d_in_p, d_out_p), lambda i: (0, 0))
            b_spec = pl.BlockSpec((1, d_out_p), lambda i: (0, 0))
        in_specs += [w_spec, b_spec]
    out_spec = pl.BlockSpec((tm, dims_p[-1]), lambda i: (i, 0))
    return in_specs, out_spec


def mlp_forward(x, prepared_params, meta, out_dtype=jnp.float32):
    """Fused MLP forward pass (single pallas_call for all layers).

    x: [B, in_dim] (rank>2 inputs are flattened like the PyTorch module).
    prepared_params / meta: from prepare_mlp_params().
    """
    if x.ndim > 2:
        x = x.reshape(x.shape[0], -1)
    B, in_dim = x.shape
    assert in_dim == meta["in_dim"], (in_dim, meta["in_dim"])

    dims_p = meta["dims_p"]
    n_layers = len(prepared_params)
    out_dim = meta["out_dim"]
    out_itemsize = jnp.dtype(out_dtype).itemsize

    tm = _choose_tm(B)
    B_pad = _round_up(B, tm)

    # Pad/cast x only when needed (weights were prepared once, off the hot path).
    if (B_pad != B) or (dims_p[0] != in_dim) or (x.dtype != jnp.bfloat16):
        x_p = jnp.zeros((B_pad, dims_p[0]), jnp.bfloat16).at[:B, :in_dim].set(
            x.astype(jnp.bfloat16))
    else:
        x_p = x

    flat_inputs = [x_p]
    for (w_p, b_p) in prepared_params:
        flat_inputs += [w_p, b_p]

    kernel = functools.partial(_fused_mlp_kernel, n_layers=n_layers)
    vmem_cap = 48 << 20  # stay well below v7x's 64 MiB/TC (and default scoped limits)

    def run(single_buffer_weights):
        budget = _vmem_budget_bytes(tm, dims_p, out_itemsize, single_buffer_weights)
        if budget > vmem_cap:
            # TODO(synk): K/N-tile oversized layers with an f32 accumulator instead.
            raise ValueError(
                f"Resident MLP footprint {budget/2**20:.1f} MiB exceeds the "
                f"{vmem_cap/2**20:.0f} MiB VMEM budget; K/N tiling not implemented.")
        vmem_limit = int(min(max(budget * 1.5 + (2 << 20), 16 << 20), vmem_cap))
        in_specs, out_spec = _build_specs(tm, dims_p, n_layers, single_buffer_weights)
        return pl.pallas_call(
            kernel,
            out_shape=jax.ShapeDtypeStruct((B_pad, dims_p[-1]), out_dtype),
            grid_spec=pltpu.PrefetchScalarGridSpec(
                num_scalar_prefetch=0,
                grid=(B_pad // tm,),
                in_specs=in_specs,
                out_specs=out_spec,
            ),
            compiler_params=pltpu.CompilerParams(
                # Batch tiles are independent -> shard across TensorCores (v7x megacore).
                dimension_semantics=("parallel",),
                vmem_limit_bytes=vmem_limit,
            ),
        )(*flat_inputs)

    try:
        out_p = run(single_buffer_weights=hasattr(pl, "Buffered"))
    except ValueError:
        raise
    except Exception:
        # Graceful fallback if this jax build rejects pipeline_mode on these specs.
        out_p = run(single_buffer_weights=False)

    # Slice off batch/feature padding outside the kernel.
    return out_p[:B, :out_dim]


def init_mlp_params(key, in_dim, hidden_dims, out_dim, dtype=jnp.float32):
    """Deterministic init mimicking nn.Linear's U(-1/sqrt(in), 1/sqrt(in))."""
    params = []
    dims = [in_dim] + list(hidden_dims) + [out_dim]
    for i in range(len(dims) - 1):
        d_in, d_out = dims[i], dims[i + 1]
        key, kw, kb = jax.random.split(key, 3)
        bound = 1.0 / jnp.sqrt(jnp.asarray(d_in, dtype))
        w = jax.random.uniform(kw, (d_in, d_out), dtype, -bound, bound)
        b = jax.random.uniform(kb, (d_out,), dtype, -bound, bound)
        params.append((w, b))
    return params


if __name__ == "__main__":
    key = jax.random.PRNGKey(0)
    k_x, k_p = jax.random.split(key)

    batch = 2
    in_dim = 16          # = 4 * 2 * 2 after flattening
    hidden_dims = [32, 32]
    out_dim = 4

    # Rank-4 input to exercise the flatten branch of MLP.forward.
    x = jax.random.normal(k_x, (batch, 4, 2, 2), dtype=jnp.float32)
    params = init_mlp_params(k_p, in_dim, hidden_dims, out_dim)

    prepared, meta = prepare_mlp_params(params)  # one-time, off the hot path
    out = mlp_forward(x, prepared, meta)
    out = jax.block_until_ready(out)

    # Reference 1: matched bf16-operand / f32-accumulate reference (tight check).
    h = x.reshape(batch, -1).astype(jnp.bfloat16)
    ref_bf16 = None
    for i, (w, b) in enumerate(params):
        y = jnp.dot(h, w.astype(jnp.bfloat16), preferred_element_type=jnp.float32) + b
        if i < len(params) - 1:
            h = jnp.maximum(y, 0.0).astype(jnp.bfloat16)
        else:
            ref_bf16 = y

    # Reference 2: full-f32 semantics of the PyTorch module (loose check, bf16 operands).
    h32 = x.reshape(batch, -1)
    for i, (w, b) in enumerate(params):
        h32 = h32 @ w + b
        if i < len(params) - 1:
            h32 = jnp.maximum(h32, 0.0)

    assert out.shape == (batch, out_dim)
    assert jnp.allclose(out, ref_bf16, atol=1e-4, rtol=1e-4)
    assert jnp.allclose(out, h32, atol=5e-2, rtol=5e-2)

    print("KERNEL_OK")
</pallas_src>

<mosaic_0001>
module attributes {stable_mosaic.version = 11 : i64} {
  func.func @_fused_mlp_kernel(%arg0: i32, %arg1: memref<16x128xbf16, #tpu.memory_space<vmem>>, %arg2: memref<128x128xbf16, #tpu.memory_space<vmem>>, %arg3: memref<1x128xf32, #tpu.memory_space<vmem>>, %arg4: memref<128x128xbf16, #tpu.memory_space<vmem>>, %arg5: memref<1x128xf32, #tpu.memory_space<vmem>>, %arg6: memref<128x128xbf16, #tpu.memory_space<vmem>>, %arg7: memref<1x128xf32, #tpu.memory_space<vmem>>, %arg8: memref<16x128xf32, #tpu.memory_space<vmem>>) attributes {dimension_semantics = [#tpu.dimension_semantics<parallel>], iteration_bounds = array<i64: 1>, scalar_prefetch = 0 : i64, scratch_operands = 0 : i64, tpu.core_type = #tpu.core_type<tc>, window_params = [{transform_indices = @transform_0, window_bounds = array<i64: 16, 128>}, {pipeline_mode = #tpu.pipeline_mode<synchronous>, transform_indices = @transform_1, window_bounds = array<i64: 128, 128>}, {pipeline_mode = #tpu.pipeline_mode<synchronous>, transform_indices = @transform_2, window_bounds = array<i64: 1, 128>}, {pipeline_mode = #tpu.pipeline_mode<synchronous>, transform_indices = @transform_3, window_bounds = array<i64: 128, 128>}, {pipeline_mode = #tpu.pipeline_mode<synchronous>, transform_indices = @transform_4, window_bounds = array<i64: 1, 128>}, {pipeline_mode = #tpu.pipeline_mode<synchronous>, transform_indices = @transform_5, window_bounds = array<i64: 128, 128>}, {pipeline_mode = #tpu.pipeline_mode<synchronous>, transform_indices = @transform_6, window_bounds = array<i64: 1, 128>}, {transform_indices = @transform_7, window_bounds = array<i64: 16, 128>}]} {
    %c0 = arith.constant 0 : index
    %c0_0 = arith.constant 0 : index
    %0 = vector.load %arg1[%c0, %c0_0] : memref<16x128xbf16, #tpu.memory_space<vmem>>, vector<16x128xbf16>
    %c0_1 = arith.constant 0 : index
    %c0_2 = arith.constant 0 : index
    %1 = vector.load %arg2[%c0_1, %c0_2] : memref<128x128xbf16, #tpu.memory_space<vmem>>, vector<128x128xbf16>
    %c0_3 = arith.constant 0 : index
    %c0_4 = arith.constant 0 : index
    %2 = vector.load %arg3[%c0_3, %c0_4] : memref<1x128xf32, #tpu.memory_space<vmem>>, vector<1x128xf32>
    %cst = arith.constant dense<0.000000e+00> : vector<16x128xf32>
    %3 = tpu.matmul %0, %1, %cst {dimension_numbers = #tpu.dot_dimension_numbers<[1], [0], [0], [1], [0, 0, 1, 1], [], []>} : vector<16x128xbf16>, vector<128x128xbf16>, vector<16x128xf32> -> vector<16x128xf32>
    %4 = vector.broadcast %2 : vector<1x128xf32> to vector<16x128xf32>
    %5 = arith.addf %3, %4 : vector<16x128xf32>
    %cst_5 = arith.constant 0.000000e+00 : f32
    %6 = vector.broadcast %cst_5 : f32 to vector<16x128xf32>
    %7 = arith.maximumf %5, %6 : vector<16x128xf32>
    %8 = arith.truncf %7 : vector<16x128xf32> to vector<16x128xbf16>
    %c0_6 = arith.constant 0 : index
    %c0_7 = arith.constant 0 : index
    %9 = vector.load %arg4[%c0_6, %c0_7] : memref<128x128xbf16, #tpu.memory_space<vmem>>, vector<128x128xbf16>
    %c0_8 = arith.constant 0 : index
    %c0_9 = arith.constant 0 : index
    %10 = vector.load %arg5[%c0_8, %c0_9] : memref<1x128xf32, #tpu.memory_space<vmem>>, vector<1x128xf32>
    %cst_10 = arith.constant dense<0.000000e+00> : vector<16x128xf32>
    %11 = tpu.matmul %8, %9, %cst_10 {dimension_numbers = #tpu.dot_dimension_numbers<[1], [0], [0], [1], [0, 0, 1, 1], [], []>} : vector<16x128xbf16>, vector<128x128xbf16>, vector<16x128xf32> -> vector<16x128xf32>
    %12 = vector.broadcast %10 : vector<1x128xf32> to vector<16x128xf32>
    %13 = arith.addf %11, %12 : vector<16x128xf32>
    %cst_11 = arith.constant 0.000000e+00 : f32
    %14 = vector.broadcast %cst_11 : f32 to vector<16x128xf32>
    %15 = arith.maximumf %13, %14 : vector<16x128xf32>
    %16 = arith.truncf %15 : vector<16x128xf32> to vector<16x128xbf16>
    %c0_12 = arith.constant 0 : index
    %c0_13 = arith.constant 0 : index
    %17 = vector.load %arg6[%c0_12, %c0_13] : memref<128x128xbf16, #tpu.memory_space<vmem>>, vector<128x128xbf16>
    %c0_14 = arith.constant 0 : index
    %c0_15 = arith.constant 0 : index
    %18 = vector.load %arg7[%c0_14, %c0_15] : memref<1x128xf32, #tpu.memory_space<vmem>>, vector<1x128xf32>
    %cst_16 = arith.constant dense<0.000000e+00> : vector<16x128xf32>
    %19 = tpu.matmul %16, %17, %cst_16 {dimension_numbers = #tpu.dot_dimension_numbers<[1], [0], [0], [1], [0, 0, 1, 1], [], []>} : vector<16x128xbf16>, vector<128x128xbf16>, vector<16x128xf32> -> vector<16x128xf32>
    %20 = vector.broadcast %18 : vector<1x128xf32> to vector<16x128xf32>
    %21 = arith.addf %19, %20 : vector<16x128xf32>
    %c0_17 = arith.constant 0 : index
    %c0_18 = arith.constant 0 : index
    %22 = vector.load %arg8[%c0_17, %c0_18] : memref<16x128xf32, #tpu.memory_space<vmem>>, vector<16x128xf32>
    tpu.vector_store %arg8[%c0_17, %c0_18], %21 {strides = array<i32>} : memref<16x128xf32, #tpu.memory_space<vmem>>, vector<16x128xf32>,
    return
  }
  func.func @transform_0(%arg0: i32) -> (i32, i32) {
    %c0_i32 = arith.constant 0 : i32
    %c0_i32_0 = arith.constant 0 : i32
    return %arg0, %c0_i32 : i32, i32
  }
  func.func @transform_1(%arg0: i32) -> (i32, i32) {
    %c0_i32 = arith.constant 0 : i32
    %c0_i32_0 = arith.constant 0 : i32
    %c0_i32_1 = arith.constant 0 : i32
    return %c0_i32, %c0_i32_0 : i32, i32
  }
  func.func @transform_2(%arg0: i32) -> (i32, i32) {
    %c0_i32 = arith.constant 0 : i32
    %c0_i32_0 = arith.constant 0 : i32
    %c0_i32_1 = arith.constant 0 : i32
    return %c0_i32, %c0_i32_0 : i32, i32
  }
  func.func @transform_3(%arg0: i32) -> (i32, i32) {
    %c0_i32 = arith.constant 0 : i32
    %c0_i32_0 = arith.constant 0 : i32
    %c0_i32_1 = arith.constant 0 : i32
    return %c0_i32, %c0_i32_0 : i32, i32
  }
  func.func @transform_4(%arg0: i32) -> (i32, i32) {
    %c0_i32 = arith.constant 0 : i32
    %c0_i32_0 = arith.constant 0 : i32
    %c0_i32_1 = arith.constant 0 : i32
    return %c0_i32, %c0_i32_0 : i32, i32
  }
  func.func @transform_5(%arg0: i32) -> (i32, i32) {
    %c0_i32 = arith.constant 0 : i32
    %c0_i32_0 = arith.constant 0 : i32
    %c0_i32_1 = arith.constant 0 : i32
    return %c0_i32, %c0_i32_0 : i32, i32
  }
  func.func @transform_6(%arg0: i32) -> (i32, i32) {
    %c0_i32 = arith.constant 0 : i32
    %c0_i32_0 = arith.constant 0 : i32
    %c0_i32_1 = arith.constant 0 : i32
    return %c0_i32, %c0_i32_0 : i32, i32
  }
  func.func @transform_7(%arg0: i32) -> (i32, i32) {
    %c0_i32 = arith.constant 0 : i32
    %c0_i32_0 = arith.constant 0 : i32
    return %arg0, %c0_i32 : i32, i32
  }
}

module attributes {stable_mosaic.version = 11 : i64} {
  func.func @_fused_mlp_kernel(%arg0: i32, %arg1: memref<16x128xbf16, #tpu.memory_space<vmem>>, %arg2: memref<128x128xbf16, #tpu.memory_space<vmem>>, %arg3: memref<1x128xf32, #tpu.memory_space<vmem>>, %arg4: memref<128x128xbf16, #tpu.memory_space<vmem>>, %arg5: memref<1x128xf32, #tpu.memory_space<vmem>>, %arg6: memref<128x128xbf16, #tpu.memory_space<vmem>>, %arg7: memref<1x128xf32, #tpu.memory_space<vmem>>, %arg8: memref<16x128xf32, #tpu.memory_space<vmem>>) attributes {dimension_semantics = [#tpu.dimension_semantics<parallel>], iteration_bounds = array<i64: 1>, scalar_prefetch = 0 : i64, scratch_operands = 0 : i64, tpu.core_type = #tpu.core_type<tc>, window_params = [{transform_indices = @transform_0, window_bounds = array<i64: 16, 128>}, {pipeline_mode = #tpu.pipeline_mode<synchronous>, transform_indices = @transform_1, window_bounds = array<i64: 128, 128>}, {pipeline_mode = #tpu.pipeline_mode<synchronous>, transform_indices = @transform_2, window_bounds = array<i64: 1, 128>}, {pipeline_mode = #tpu.pipeline_mode<synchronous>, transform_indices = @transform_3, window_bounds = array<i64: 128, 128>}, {pipeline_mode = #tpu.pipeline_mode<synchronous>, transform_indices = @transform_4, window_bounds = array<i64: 1, 128>}, {pipeline_mode = #tpu.pipeline_mode<synchronous>, transform_indices = @transform_5, window_bounds = array<i64: 128, 128>}, {pipeline_mode = #tpu.pipeline_mode<synchronous>, transform_indices = @transform_6, window_bounds = array<i64: 1, 128>}, {transform_indices = @transform_7, window_bounds = array<i64: 16, 128>}]} {
    %c0 = arith.constant 0 : index
    %c0_0 = arith.constant 0 : index
    %0 = vector.load %arg1[%c0, %c0_0] : memref<16x128xbf16, #tpu.memory_space<vmem>>, vector<16x128xbf16>
    %c0_1 = arith.constant 0 : index
    %c0_2 = arith.constant 0 : index
    %1 = vector.load %arg2[%c0_1, %c0_2] : memref<128x128xbf16, #tpu.memory_space<vmem>>, vector<128x128xbf16>
    %c0_3 = arith.constant 0 : index
    %c0_4 = arith.constant 0 : index
    %2 = vector.load %arg3[%c0_3, %c0_4] : memref<1x128xf32, #tpu.memory_space<vmem>>, vector<1x128xf32>
    %cst = arith.constant dense<0.000000e+00> : vector<16x128xf32>
    %3 = tpu.matmul %0, %1, %cst {dimension_numbers = #tpu.dot_dimension_numbers<[1], [0], [0], [1], [0, 0, 1, 1], [], []>} : vector<16x128xbf16>, vector<128x128xbf16>, vector<16x128xf32> -> vector<16x128xf32>
    %4 = vector.broadcast %2 : vector<1x128xf32> to vector<16x128xf32>
    %5 = arith.addf %3, %4 : vector<16x128xf32>
    %cst_5 = arith.constant 0.000000e+00 : f32
    %6 = vector.broadcast %cst_5 : f32 to vector<16x128xf32>
    %7 = arith.maximumf %5, %6 : vector<16x128xf32>
    %8 = arith.truncf %7 : vector<16x128xf32> to vector<16x128xbf16>
    %c0_6 = arith.constant 0 : index
    %c0_7 = arith.constant 0 : index
    %9 = vector.load %arg4[%c0_6, %c0_7] : memref<128x128xbf16, #tpu.memory_space<vmem>>, vector<128x128xbf16>
    %c0_8 = arith.constant 0 : index
    %c0_9 = arith.constant 0 : index
    %10 = vector.load %arg5[%c0_8, %c0_9] : memref<1x128xf32, #tpu.memory_space<vmem>>, vector<1x128xf32>
    %cst_10 = arith.constant dense<0.000000e+00> : vector<16x128xf32>
    %11 = tpu.matmul %8, %9, %cst_10 {dimension_numbers = #tpu.dot_dimension_numbers<[1], [0], [0], [1], [0, 0, 1, 1], [], []>} : vector<16x128xbf16>, vector<128x128xbf16>, vector<16x128xf32> -> vector<16x128xf32>
    %12 = vector.broadcast %10 : vector<1x128xf32> to vector<16x128xf32>
    %13 = arith.addf %11, %12 : vector<16x128xf32>
    %cst_11 = arith.constant 0.000000e+00 : f32
    %14 = vector.broadcast %cst_11 : f32 to vector<16x128xf32>
    %15 = arith.maximumf %13, %14 : vector<16x128xf32>
    %16 = arith.truncf %15 : vector<16x128xf32> to vector<16x128xbf16>
    %c0_12 = arith.constant 0 : index
    %c0_13 = arith.constant 0 : index
    %17 = vector.load %arg6[%c0_12, %c0_13] : memref<128x128xbf16, #tpu.memory_space<vmem>>, vector<128x128xbf16>
    %c0_14 = arith.constant 0 : index
    %c0_15 = arith.constant 0 : index
    %18 = vector.load %arg7[%c0_14, %c0_15] : memref<1x128xf32, #tpu.memory_space<vmem>>, vector<1x128xf32>
    %cst_16 = arith.constant dense<0.000000e+00> : vector<16x128xf32>
    %19 = tpu.matmul %16, %17, %cst_16 {dimension_numbers = #tpu.dot_dimension_numbers<[1], [0], [0], [1], [0, 0, 1, 1], [], []>} : vector<16x128xbf16>, vector<128x128xbf16>, vector<16x128xf32> -> vector<16x128xf32>
    %20 = vector.broadcast %18 : vector<1x128xf32> to vector<16x128xf32>
    %21 = arith.addf %19, %20 : vector<16x128xf32>
    %c0_17 = arith.constant 0 : index
    %c0_18 = arith.constant 0 : index
    %22 = vector.load %arg8[%c0_17, %c0_18] : memref<16x128xf32, #tpu.memory_space<vmem>>, vector<16x128xf32>
    tpu.vector_store %arg8[%c0_17, %c0_18], %21 {strides = array<i32>} : memref<16x128xf32, #tpu.memory_space<vmem>>, vector<16x128xf32>,
    return
  }
  func.func @transform_0(%arg0: i32) -> (i32, i32) {
    %c0_i32 = arith.constant 0 : i32
    %c0_i32_0 = arith.constant 0 : i32
    return %arg0, %c0_i32 : i32, i32
  }
  func.func @transform_1(%arg0: i32) -> (i32, i32) {
    %c0_i32 = arith.constant 0 : i32
    %c0_i32_0 = arith.constant 0 : i32
    %c0_i32_1 = arith.constant 0 : i32
    return %c0_i32, %c0_i32_0 : i32, i32
  }
  func.func @transform_2(%arg0: i32) -> (i32, i32) {
    %c0_i32 = arith.constant 0 : i32
    %c0_i32_0 = arith.constant 0 : i32
    %c0_i32_1 = arith.constant 0 : i32
    return %c0_i32, %c0_i32_0 : i32, i32
  }
  func.func @transform_3(%arg0: i32) -> (i32, i32) {
    %c0_i32 = arith.constant 0 : i32
    %c0_i32_0 = arith.constant 0 : i32
    %c0_i32_1 = arith.constant 0 : i32
    return %c0_i32, %c0_i32_0 : i32, i32
  }
  func.func @transform_4(%arg0: i32) -> (i32, i32) {
    %c0_i32 = arith.constant 0 : i32
    %c0_i32_0 = arith.constant 0 : i32
    %c0_i32_1 = arith.constant 0 : i32
    return %c0_i32, %c0_i32_0 : i32, i32
  }
  func.func @transform_5(%arg0: i32) -> (i32, i32) {
    %c0_i32 = arith.constant 0 : i32
    %c0_i32_0 = arith.constant 0 : i32
    %c0_i32_1 = arith.constant 0 : i32
    return %c0_i32, %c0_i32_0 : i32, i32
  }
  func.func @transform_6(%arg0: i32) -> (i32, i32) {
    %c0_i32 = arith.constant 0 : i32
    %c0_i32_0 = arith.constant 0 : i32
    %c0_i32_1 = arith.constant 0 : i32
    return %c0_i32, %c0_i32_0 : i32, i32
  }
  func.func @transform_7(%arg0: i32) -> (i32, i32) {
    %c0_i32 = arith.constant 0 : i32
    %c0_i32_0 = arith.constant 0 : i32
    return %arg0, %c0_i32 : i32, i32
  }
}

</mosaic_0001>

<llo_original>
// kernel: tpu_custom_call.1
$region0: #{tpu_custom_call.1}
  #allocation0 [shape = 'u32[]', space=smem, size = 0x4, offset = 0x4, fixed_abs, tag = 'smem constant byte address 0x4 - core index']
  #allocation1 [shape = 'u32[72,128]{1,0:T(1,128)}', space=vmem, size = 0x9000, scoped, tag = 'internal scratch']
  %s0 = inlined_call_operand.hbm [shape: bf16[16,128], index: 0, kind: input, shape index: {}]
  %s1 = inlined_call_operand.hbm [shape: bf16[128,128], index: 1, kind: input, shape index: {}]
  %s2 = inlined_call_operand.vmem [shape: f32[1,128], index: 2, kind: input, shape index: {}]
  %s3 = inlined_call_operand.hbm [shape: bf16[128,128], index: 3, kind: input, shape index: {}]
  %s4 = inlined_call_operand.vmem [shape: f32[1,128], index: 4, kind: input, shape index: {}]
  %s5 = inlined_call_operand.hbm [shape: bf16[128,128], index: 5, kind: input, shape index: {}]
  %s6 = inlined_call_operand.vmem [shape: f32[1,128], index: 6, kind: input, shape index: {}]
  %s7 = inlined_call_operand.hbm [shape: f32[16,128], index: 7, kind: output, shape index: {}]
  %s8 = sld [smem:[#allocation0]]
  $region54: #{tpu_custom_call.1} parent=0
    _
  %s10 = ssub.s32 1, %s8
  %s11 = scalar_select 0, %s10, %s8
  $region1: #{tpu_custom_call.1} parent=0
    #allocation2 [shape = 'u8[4096]{0}', space=vmem, size = 0x1000, scoped, tag = 'input window, operand 0, single buffered']
    #allocation3 [shape = 's32[1]{0}', space=sflag, size = 0x4, scoped, tag = 'scoped memory for tpu_custom_call.1']
    #allocation4 [shape = 's32[1]{0}', space=sflag, size = 0x4, scoped, tag = 'scoped memory for tpu_custom_call.1']
    #allocation5 [shape = 'u8[32768]{0}', space=vmem, size = 0x8000, scoped, tag = 'input window, operand 1, single buffered']
    #allocation6 [shape = 's32[1]{0}', space=sflag, size = 0x4, scoped, tag = 'scoped memory for tpu_custom_call.1']
    #allocation7 [shape = 'u8[32768]{0}', space=vmem, size = 0x8000, scoped, tag = 'input window, operand 3, single buffered']
    #allocation8 [shape = 'u8[32768]{0}', space=vmem, size = 0x8000, scoped, tag = 'input window, operand 5, single buffered']
    #allocation9 [shape = 's32[1]{0}', space=sflag, size = 0x4, scoped, tag = 'scoped memory for tpu_custom_call.1']
    #allocation10 [shape = 'u8[8192]{0}', space=vmem, size = 0x2000, scoped, tag = 'output window, operand 0, single buffered']
    %12 = vsyncpa [#allocation3], 0
    %13 = vsyncpa [#allocation6], 0
    %14 = vsyncpa [#allocation9], 0
    %15 = vsyncpa [#allocation4], 0
    // Predicated region
    $region2: #{tpu_custom_call.1} parent=1 // pred_check
      _
    $region3: #{tpu_custom_call.1} parent=1 // pred_check_branch
      %17 = sbr.rel (0) target = $region5
    $region4: #{tpu_custom_call.1} parent=1 // pred_region
      %19 = vsyncadd [#allocation3], 0
      %s20 = sshll.u32 %s0, 4
      %s21 = int_to_ptr.hbm [resolvable:$true] %s20
      %s22 = sshll.u32 [#allocation2], 4
      %s23 = int_to_ptr.vmem [resolvable:$true] %s22
      %28 = dma.hbm_to_vmem [thread:$0]  %s21, 128, %s23, [#allocation3], 64, 64, 4
    $region5: #{tpu_custom_call.1} parent=1 // pred_fallthru
      _
    // Predicated region
    $region6: #{tpu_custom_call.1} parent=1 // pred_check
      _
    $region7: #{tpu_custom_call.1} parent=1 // pred_check_branch
      %30 = sbr.rel (0) target = $region9
    $region8: #{tpu_custom_call.1} parent=1 // pred_region
      %32 = vsyncadd [#allocation6], 0
      %s33 = sshll.u32 %s1, 4
      %s34 = int_to_ptr.hbm [resolvable:$true] %s33
      %s35 = sshll.u32 [#allocation5], 4
      %s36 = int_to_ptr.vmem [resolvable:$true] %s35
      %41 = dma.hbm_to_vmem [thread:$0]  %s34, 1024, %s36, [#allocation6], 64, 64, 4
    $region9: #{tpu_custom_call.1} parent=1 // pred_fallthru
      _
    // Predicated region
    $region10: #{tpu_custom_call.1} parent=1 // pred_check
      _
    $region11: #{tpu_custom_call.1} parent=1 // pred_check_branch
      %43 = sbr.rel (0) target = $region13
    $region12: #{tpu_custom_call.1} parent=1 // pred_region
      _
    $region13: #{tpu_custom_call.1} parent=1 // pred_fallthru
      _
    // Predicated region
    $region14: #{tpu_custom_call.1} parent=1 // pred_check
      _
    $region15: #{tpu_custom_call.1} parent=1 // pred_check_branch
      %45 = sbr.rel (0) target = $region17
    $region16: #{tpu_custom_call.1} parent=1 // pred_region
      %47 = vsyncadd [#allocation6], 0
      %s48 = sshll.u32 %s3, 4
      %s49 = int_to_ptr.hbm [resolvable:$true] %s48
      %s50 = sshll.u32 [#allocation7], 4
      %s51 = int_to_ptr.vmem [resolvable:$true] %s50
      %56 = dma.hbm_to_vmem [thread:$0]  %s49, 1024, %s51, [#allocation6], 64, 64, 4
    $region17: #{tpu_custom_call.1} parent=1 // pred_fallthru
      _
    // Predicated region
    $region18: #{tpu_custom_call.1} parent=1 // pred_check
      _
    $region19: #{tpu_custom_call.1} parent=1 // pred_check_branch
      %58 = sbr.rel (0) target = $region21
    $region20: #{tpu_custom_call.1} parent=1 // pred_region
      _
    $region21: #{tpu_custom_call.1} parent=1 // pred_fallthru
      _
    // Predicated region
    $region22: #{tpu_custom_call.1} parent=1 // pred_check
      _
    $region23: #{tpu_custom_call.1} parent=1 // pred_check_branch
      %60 = sbr.rel (0) target = $region25
    $region24: #{tpu_custom_call.1} parent=1 // pred_region
      %62 = vsyncadd [#allocation9], 0
      %s63 = sshll.u32 %s5, 4
      %s64 = int_to_ptr.hbm [resolvable:$true] %s63
      %s65 = sshll.u32 [#allocation8], 4
      %s66 = int_to_ptr.vmem [resolvable:$true] %s65
      %71 = dma.hbm_to_vmem [thread:$0]  %s64, 1024, %s66, [#allocation9], 64, 64, 4
    $region25: #{tpu_custom_call.1} parent=1 // pred_fallthru
      _
    // Predicated region
    $region26: #{tpu_custom_call.1} parent=1 // pred_check
      _
    $region27: #{tpu_custom_call.1} parent=1 // pred_check_branch
      %73 = sbr.rel (0) target = $region29
    $region28: #{tpu_custom_call.1} parent=1 // pred_region
      _
    $region29: #{tpu_custom_call.1} parent=1 // pred_fallthru
      _
    // Predicated region
    $region30: #{tpu_custom_call.1} parent=1 // pred_check
      _
    $region31: #{tpu_custom_call.1} parent=1 // pred_check_branch
      %75 = sbr.rel (0) target = $region33
    $region32: #{tpu_custom_call.1} parent=1 // pred_region
      %77 = dma.done [#allocation3], 128
    $region33: #{tpu_custom_call.1} parent=1 // pred_fallthru
      _
    // Predicated region
    $region34: #{tpu_custom_call.1} parent=1 // pred_check
      _
    $region35: #{tpu_custom_call.1} parent=1 // pred_check_branch
      %79 = sbr.rel (0) target = $region37
    $region36: #{tpu_custom_call.1} parent=1 // pred_region
      %81 = dma.done [#allocation6], 1024
    $region37: #{tpu_custom_call.1} parent=1 // pred_fallthru
      _
    // Predicated region
    $region38: #{tpu_custom_call.1} parent=1 // pred_check
      _
    $region39: #{tpu_custom_call.1} parent=1 // pred_check_branch
      %83 = sbr.rel (0) target = $region41
    $region40: #{tpu_custom_call.1} parent=1 // pred_region
      %85 = dma.done [#allocation6], 1024
    $region41: #{tpu_custom_call.1} parent=1 // pred_fallthru
      _
    // Predicated region
    $region42: #{tpu_custom_call.1} parent=1 // pred_check
      _
    $region43: #{tpu_custom_call.1} parent=1 // pred_check_branch
      %87 = sbr.rel (0) target = $region45
    $region44: #{tpu_custom_call.1} parent=1 // pred_region
      %89 = dma.done [#allocation9], 1024
    $region45: #{tpu_custom_call.1} parent=1 // pred_fallthru
      _
    %v90 = vld [vmem:[#allocation2] sm:$0xf]
    %v91 = vld [vmem:[#allocation2 + $0x4] sm:$0xf]
    %v92 = vld [vmem:[#allocation5] sm:$0xf]
    %v93 = vld [vmem:[#allocation5 + $0x4] sm:$0xf]
    %v94 = vld [vmem:[#allocation5 + $0x8] sm:$0xf]
    %v95 = vld [vmem:[#allocation5 + $0xc] sm:$0xf]
    %v96 = vld [vmem:[#allocation5 + $0x10] sm:$0xf]
    %v97 = vld [vmem:[#allocation5 + $0x14] sm:$0xf]
    %v98 = vld [vmem:[#allocation5 + $0x18] sm:$0xf]
    %v99 = vld [vmem:[#allocation5 + $0x1c] sm:$0xf]
    %v100 = vld [vmem:[#allocation5 + $0x20] sm:$0xf]
    %v101 = vld [vmem:[#allocation5 + $0x24] sm:$0xf]
    %v102 = vld [vmem:[#allocation5 + $0x28] sm:$0xf]
    %v103 = vld [vmem:[#allocation5 + $0x2c] sm:$0xf]
    %v104 = vld [vmem:[#allocation5 + $0x30] sm:$0xf]
    %v105 = vld [vmem:[#allocation5 + $0x34] sm:$0xf]
    %v106 = vld [vmem:[#allocation5 + $0x38] sm:$0xf]
    %v107 = vld [vmem:[#allocation5 + $0x3c] sm:$0xf]
    %v108 = vld [vmem:[%s2] sm:$0x1]
    %v110 = vperm.slane %v108, 0
    %v114 = vunpack.c.l.b16 %v90
    %v115 = vunpack.c.l.b16 %v91
    %v116 = vpack.c.b16 %v115, %v114
    %v134 = vunpack.c.l.b16 %v92
    %v135 = vunpack.c.l.b16 %v93
    %v136 = vunpack.c.l.b16 %v94
    %v137 = vunpack.c.l.b16 %v95
    %v138 = vunpack.c.l.b16 %v96
    %v139 = vunpack.c.l.b16 %v97
    %v140 = vunpack.c.l.b16 %v98
    %v141 = vunpack.c.l.b16 %v99
    %v142 = vunpack.c.l.b16 %v100
    %v143 = vunpack.c.l.b16 %v101
    %v144 = vunpack.c.l.b16 %v102
    %v145 = vunpack.c.l.b16 %v103
    %v146 = vunpack.c.l.b16 %v104
    %v147 = vunpack.c.l.b16 %v105
    %v148 = vunpack.c.l.b16 %v106
    %v149 = vunpack.c.l.b16 %v107
    %v150 = vpack.c.b16 %v135, %v134
    %v151 = vpack.c.b16 %v137, %v136
    %v152 = vpack.c.b16 %v139, %v138
    %v153 = vpack.c.b16 %v141, %v140
    %v154 = vpack.c.b16 %v143, %v142
    %v155 = vpack.c.b16 %v145, %v144
    %v156 = vpack.c.b16 %v147, %v146
    %v157 = vpack.c.b16 %v149, %v148
    %166 = vmatpush.bf16.msra.mxu0 %v157
    %167 = vmatpush.bf16.msra.mxu0 %v156
    %168 = vmatpush.bf16.msra.mxu0 %v155
    %169 = vmatpush.bf16.msra.mxu0 %v154
    %170 = vmatpush.bf16.msra.mxu0 %v153
    %171 = vmatpush.bf16.msra.mxu0 %v152
    %172 = vmatpush.bf16.msra.mxu0 %v151
    %173 = vmatpush.bf16.msra.mxu0 %v150
    %174 = vmatmul.bf16.gmra.mxu0 %v116
    %v175 = vpop.f32.mrf.mxu0
    %v176 = vadd.f32 %v110, %v175
    %v177 = vpop.f32.mrf.mxu0
    %v178 = vadd.f32 %v110, %v177
    %179 = vdwg.mxu0
    %v180 = vmax.f32 %v176, 0.0
    %v181 = vmax.f32 %v178, 0.0
    %v182 = vpack.c.bf16 %v181, %v180
    %v183 = vld [vmem:[#allocation7] sm:$0xf]
    %v184 = vld [vmem:[#allocation7 + $0x4] sm:$0xf]
    %v185 = vld [vmem:[#allocation7 + $0x8] sm:$0xf]
    %v186 = vld [vmem:[#allocation7 + $0xc] sm:$0xf]
    %v187 = vld [vmem:[#allocation7 + $0x10] sm:$0xf]
    %v188 = vld [vmem:[#allocation7 + $0x14] sm:$0xf]
    %v189 = vld [vmem:[#allocation7 + $0x18] sm:$0xf]
    %v190 = vld [vmem:[#allocation7 + $0x1c] sm:$0xf]
    %v191 = vld [vmem:[#allocation7 + $0x20] sm:$0xf]
    %v192 = vld [vmem:[#allocation7 + $0x24] sm:$0xf]
    %v193 = vld [vmem:[#allocation7 + $0x28] sm:$0xf]
    %v194 = vld [vmem:[#allocation7 + $0x2c] sm:$0xf]
    %v195 = vld [vmem:[#allocation7 + $0x30] sm:$0xf]
    %v196 = vld [vmem:[#allocation7 + $0x34] sm:$0xf]
    %v197 = vld [vmem:[#allocation7 + $0x38] sm:$0xf]
    %v198 = vld [vmem:[#allocation7 + $0x3c] sm:$0xf]
    %v199 = vld [vmem:[%s4] sm:$0x1]
    %v201 = vperm.slane %v199, 0
    %v219 = vunpack.c.l.b16 %v183
    %v220 = vunpack.c.l.b16 %v184
    %v221 = vunpack.c.l.b16 %v185
    %v222 = vunpack.c.l.b16 %v186
    %v223 = vunpack.c.l.b16 %v187
    %v224 = vunpack.c.l.b16 %v188
    %v225 = vunpack.c.l.b16 %v189
    %v226 = vunpack.c.l.b16 %v190
    %v227 = vunpack.c.l.b16 %v191
    %v228 = vunpack.c.l.b16 %v192
    %v229 = vunpack.c.l.b16 %v193
    %v230 = vunpack.c.l.b16 %v194
    %v231 = vunpack.c.l.b16 %v195
    %v232 = vunpack.c.l.b16 %v196
    %v233 = vunpack.c.l.b16 %v197
    %v234 = vunpack.c.l.b16 %v198
    %v235 = vpack.c.b16 %v220, %v219
    %v236 = vpack.c.b16 %v222, %v221
    %v237 = vpack.c.b16 %v224, %v223
    %v238 = vpack.c.b16 %v226, %v225
    %v239 = vpack.c.b16 %v228, %v227
    %v240 = vpack.c.b16 %v230, %v229
    %v241 = vpack.c.b16 %v232, %v231
    %v242 = vpack.c.b16 %v234, %v233
    %251 = vmatpush.bf16.msra.mxu0 %v242
    %252 = vmatpush.bf16.msra.mxu0 %v241
    %253 = vmatpush.bf16.msra.mxu0 %v240
    %254 = vmatpush.bf16.msra.mxu0 %v239
    %255 = vmatpush.bf16.msra.mxu0 %v238
    %256 = vmatpush.bf16.msra.mxu0 %v237
    %257 = vmatpush.bf16.msra.mxu0 %v236
    %258 = vmatpush.bf16.msra.mxu0 %v235
    %259 = vmatmul.bf16.gmra.mxu0 %v182
    %v260 = vpop.f32.mrf.mxu0
    %v261 = vadd.f32 %v201, %v260
    %v262 = vpop.f32.mrf.mxu0
    %v263 = vadd.f32 %v201, %v262
    %264 = vdwg.mxu0
    %v265 = vmax.f32 %v261, 0.0
    %v266 = vmax.f32 %v263, 0.0
    %v267 = vpack.c.bf16 %v266, %v265
    %v268 = vld [vmem:[#allocation8] sm:$0xf]
    %v269 = vld [vmem:[#allocation8 + $0x4] sm:$0xf]
    %v270 = vld [vmem:[#allocation8 + $0x8] sm:$0xf]
    %v271 = vld [vmem:[#allocation8 + $0xc] sm:$0xf]
    %v272 = vld [vmem:[#allocation8 + $0x10] sm:$0xf]
    %v273 = vld [vmem:[#allocation8 + $0x14] sm:$0xf]
    %v274 = vld [vmem:[#allocation8 + $0x18] sm:$0xf]
    %v275 = vld [vmem:[#allocation8 + $0x1c] sm:$0xf]
    %v276 = vld [vmem:[#allocation8 + $0x20] sm:$0xf]
    %v277 = vld [vmem:[#allocation8 + $0x24] sm:$0xf]
    %v278 = vld [vmem:[#allocation8 + $0x28] sm:$0xf]
    %v279 = vld [vmem:[#allocation8 + $0x2c] sm:$0xf]
    %v280 = vld [vmem:[#allocation8 + $0x30] sm:$0xf]
    %v281 = vld [vmem:[#allocation8 + $0x34] sm:$0xf]
    %v282 = vld [vmem:[#allocation8 + $0x38] sm:$0xf]
    %v283 = vld [vmem:[#allocation8 + $0x3c] sm:$0xf]
    %v284 = vld [vmem:[%s6] sm:$0x1]
    %v286 = vperm.slane %v284, 0
    %v304 = vunpack.c.l.b16 %v268
    %v305 = vunpack.c.l.b16 %v269
    %v306 = vunpack.c.l.b16 %v270
    %v307 = vunpack.c.l.b16 %v271
    %v308 = vunpack.c.l.b16 %v272
    %v309 = vunpack.c.l.b16 %v273
    %v310 = vunpack.c.l.b16 %v274
    %v311 = vunpack.c.l.b16 %v275
    %v312 = vunpack.c.l.b16 %v276
    %v313 = vunpack.c.l.b16 %v277
    %v314 = vunpack.c.l.b16 %v278
    %v315 = vunpack.c.l.b16 %v279
    %v316 = vunpack.c.l.b16 %v280
    %v317 = vunpack.c.l.b16 %v281
    %v318 = vunpack.c.l.b16 %v282
    %v319 = vunpack.c.l.b16 %v283
    %v320 = vpack.c.b16 %v305, %v304
    %v321 = vpack.c.b16 %v307, %v306
    %v322 = vpack.c.b16 %v309, %v308
    %v323 = vpack.c.b16 %v311, %v310
    %v324 = vpack.c.b16 %v313, %v312
    %v325 = vpack.c.b16 %v315, %v314
    %v326 = vpack.c.b16 %v317, %v316
    %v327 = vpack.c.b16 %v319, %v318
    %336 = vmatpush.bf16.msra.mxu0 %v327
    %337 = vmatpush.bf16.msra.mxu0 %v326
    %338 = vmatpush.bf16.msra.mxu0 %v325
    %339 = vmatpush.bf16.msra.mxu0 %v324
    %340 = vmatpush.bf16.msra.mxu0 %v323
    %341 = vmatpush.bf16.msra.mxu0 %v322
    %342 = vmatpush.bf16.msra.mxu0 %v321
    %343 = vmatpush.bf16.msra.mxu0 %v320
    %344 = vmatmul.bf16.gmra.mxu0 %v267
    %v345 = vpop.f32.mrf.mxu0
    %v346 = vadd.f32 %v286, %v345
    %v347 = vpop.f32.mrf.mxu0
    %v348 = vadd.f32 %v286, %v347
    %349 = vdwg.mxu0
    %350 = vst [vmem:[#allocation10] sm:$0xff] %v346
    %351 = vst [vmem:[#allocation10 + $0x8] sm:$0xff] %v348
    // Predicated region
    $region46: #{tpu_custom_call.1} parent=1 // pred_check
      _
    $region47: #{tpu_custom_call.1} parent=1 // pred_check_branch
      %353 = sbr.rel (0) target = $region49
    $region48: #{tpu_custom_call.1} parent=1 // pred_region
      %355 = vsyncadd [#allocation4], 0
      %s356 = sshll.u32 [#allocation10], 4
      %s357 = int_to_ptr.vmem [resolvable:$true] %s356
      %s358 = sshll.u32 %s7, 4
      %s359 = int_to_ptr.hbm [resolvable:$true] %s358
      %364 = dma.vmem_to_hbm [thread:$0]  %s357, 256, %s359, [#allocation4], 128, 128, 8
    $region49: #{tpu_custom_call.1} parent=1 // pred_fallthru
      _
    // Predicated region
    $region50: #{tpu_custom_call.1} parent=1 // pred_check
      _
    $region51: #{tpu_custom_call.1} parent=1 // pred_check_branch
      %366 = sbr.rel (0) target = $region53
    $region52: #{tpu_custom_call.1} parent=1 // pred_region
      %368 = dma.done [#allocation4], 256
    $region53: #{tpu_custom_call.1} parent=1 // pred_fallthru
      _
    %369 = vsyncpa [#allocation3], 1
    %370 = vsyncpa [#allocation6], 1
    %371 = vsyncpa [#allocation9], 1
    %372 = vsyncpa [#allocation4], 1

// kernel: tpu_custom_call.1
$region0: #{tpu_custom_call.1}
  #allocation0 [shape = 'u32[]', space=smem, size = 0x4, offset = 0x4, fixed_abs, tag = 'smem constant byte address 0x4 - core index']
  #allocation1 [shape = 'u32[72,128]{1,0:T(1,128)}', space=vmem, size = 0x9000, scoped, tag = 'internal scratch']
  %s0 = inlined_call_operand.hbm [shape: bf16[16,128], index: 0, kind: input, shape index: {}]
  %s1 = inlined_call_operand.hbm [shape: bf16[128,128], index: 1, kind: input, shape index: {}]
  %s2 = inlined_call_operand.vmem [shape: f32[1,128], index: 2, kind: input, shape index: {}]
  %s3 = inlined_call_operand.hbm [shape: bf16[128,128], index: 3, kind: input, shape index: {}]
  %s4 = inlined_call_operand.vmem [shape: f32[1,128], index: 4, kind: input, shape index: {}]
  %s5 = inlined_call_operand.hbm [shape: bf16[128,128], index: 5, kind: input, shape index: {}]
  %s6 = inlined_call_operand.vmem [shape: f32[1,128], index: 6, kind: input, shape index: {}]
  %s7 = inlined_call_operand.hbm [shape: f32[16,128], index: 7, kind: output, shape index: {}]
  %s8 = sld [smem:[#allocation0]]
  $region54: #{tpu_custom_call.1} parent=0
    _
  %s10 = ssub.s32 1, %s8
  %s11 = scalar_select 0, %s10, %s8
  $region1: #{tpu_custom_call.1} parent=0
    #allocation2 [shape = 'u8[4096]{0}', space=vmem, size = 0x1000, scoped, tag = 'input window, operand 0, single buffered']
    #allocation3 [shape = 's32[1]{0}', space=sflag, size = 0x4, scoped, tag = 'scoped memory for tpu_custom_call.1']
    #allocation4 [shape = 's32[1]{0}', space=sflag, size = 0x4, scoped, tag = 'scoped memory for tpu_custom_call.1']
    #allocation5 [shape = 'u8[32768]{0}', space=vmem, size = 0x8000, scoped, tag = 'input window, operand 1, single buffered']
    #allocation6 [shape = 's32[1]{0}', space=sflag, size = 0x4, scoped, tag = 'scoped memory for tpu_custom_call.1']
    #allocation7 [shape = 'u8[32768]{0}', space=vmem, size = 0x8000, scoped, tag = 'input window, operand 3, single buffered']
    #allocation8 [shape = 'u8[32768]{0}', space=vmem, size = 0x8000, scoped, tag = 'input window, operand 5, single buffered']
    #allocation9 [shape = 's32[1]{0}', space=sflag, size = 0x4, scoped, tag = 'scoped memory for tpu_custom_call.1']
    #allocation10 [shape = 'u8[8192]{0}', space=vmem, size = 0x2000, scoped, tag = 'output window, operand 0, single buffered']
    %12 = vsyncpa [#allocation3], 0
    %13 = vsyncpa [#allocation6], 0
    %14 = vsyncpa [#allocation9], 0
    %15 = vsyncpa [#allocation4], 0
    // Predicated region
    $region2: #{tpu_custom_call.1} parent=1 // pred_check
      _
    $region3: #{tpu_custom_call.1} parent=1 // pred_check_branch
      %17 = sbr.rel (0) target = $region5
    $region4: #{tpu_custom_call.1} parent=1 // pred_region
      %19 = vsyncadd [#allocation3], 0
      %s20 = sshll.u32 %s0, 4
      %s21 = int_to_ptr.hbm [resolvable:$true] %s20
      %s22 = sshll.u32 [#allocation2], 4
      %s23 = int_to_ptr.vmem [resolvable:$true] %s22
      %28 = dma.hbm_to_vmem [thread:$0]  %s21, 128, %s23, [#allocation3], 64, 64, 4
    $region5: #{tpu_custom_call.1} parent=1 // pred_fallthru
      _
    // Predicated region
    $region6: #{tpu_custom_call.1} parent=1 // pred_check
      _
    $region7: #{tpu_custom_call.1} parent=1 // pred_check_branch
      %30 = sbr.rel (0) target = $region9
    $region8: #{tpu_custom_call.1} parent=1 // pred_region
      %32 = vsyncadd [#allocation6], 0
      %s33 = sshll.u32 %s1, 4
      %s34 = int_to_ptr.hbm [resolvable:$true] %s33
      %s35 = sshll.u32 [#allocation5], 4
      %s36 = int_to_ptr.vmem [resolvable:$true] %s35
      %41 = dma.hbm_to_vmem [thread:$0]  %s34, 1024, %s36, [#allocation6], 64, 64, 4
    $region9: #{tpu_custom_call.1} parent=1 // pred_fallthru
      _
    // Predicated region
    $region10: #{tpu_custom_call.1} parent=1 // pred_check
      _
    $region11: #{tpu_custom_call.1} parent=1 // pred_check_branch
      %43 = sbr.rel (0) target = $region13
    $region12: #{tpu_custom_call.1} parent=1 // pred_region
      _
    $region13: #{tpu_custom_call.1} parent=1 // pred_fallthru
      _
    // Predicated region
    $region14: #{tpu_custom_call.1} parent=1 // pred_check
      _
    $region15: #{tpu_custom_call.1} parent=1 // pred_check_branch
      %45 = sbr.rel (0) target = $region17
    $region16: #{tpu_custom_call.1} parent=1 // pred_region
      %47 = vsyncadd [#allocation6], 0
      %s48 = sshll.u32 %s3, 4
      %s49 = int_to_ptr.hbm [resolvable:$true] %s48
      %s50 = sshll.u32 [#allocation7], 4
      %s51 = int_to_ptr.vmem [resolvable:$true] %s50
      %56 = dma.hbm_to_vmem [thread:$0]  %s49, 1024, %s51, [#allocation6], 64, 64, 4
    $region17: #{tpu_custom_call.1} parent=1 // pred_fallthru
      _
    // Predicated region
    $region18: #{tpu_custom_call.1} parent=1 // pred_check
      _
    $region19: #{tpu_custom_call.1} parent=1 // pred_check_branch
      %58 = sbr.rel (0) target = $region21
    $region20: #{tpu_custom_call.1} parent=1 // pred_region
      _
    $region21: #{tpu_custom_call.1} parent=1 // pred_fallthru
      _
    // Predicated region
    $region22: #{tpu_custom_call.1} parent=1 // pred_check
      _
    $region23: #{tpu_custom_call.1} parent=1 // pred_check_branch
      %60 = sbr.rel (0) target = $region25
    $region24: #{tpu_custom_call.1} parent=1 // pred_region
      %62 = vsyncadd [#allocation9], 0
      %s63 = sshll.u32 %s5, 4
      %s64 = int_to_ptr.hbm [resolvable:$true] %s63
      %s65 = sshll.u32 [#allocation8], 4
      %s66 = int_to_ptr.vmem [resolvable:$true] %s65
      %71 = dma.hbm_to_vmem [thread:$0]  %s64, 1024, %s66, [#allocation9], 64, 64, 4
    $region25: #{tpu_custom_call.1} parent=1 // pred_fallthru
      _
    // Predicated region
    $region26: #{tpu_custom_call.1} parent=1 // pred_check
      _
    $region27: #{tpu_custom_call.1} parent=1 // pred_check_branch
      %73 = sbr.rel (0) target = $region29
    $region28: #{tpu_custom_call.1} parent=1 // pred_region
      _
    $region29: #{tpu_custom_call.1} parent=1 // pred_fallthru
      _
    // Predicated region
    $region30: #{tpu_custom_call.1} parent=1 // pred_check
      _
    $region31: #{tpu_custom_call.1} parent=1 // pred_check_branch
      %75 = sbr.rel (0) target = $region33
    $region32: #{tpu_custom_call.1} parent=1 // pred_region
      %77 = dma.done [#allocation3], 128
    $region33: #{tpu_custom_call.1} parent=1 // pred_fallthru
      _
    // Predicated region
    $region34: #{tpu_custom_call.1} parent=1 // pred_check
      _
    $region35: #{tpu_custom_call.1} parent=1 // pred_check_branch
      %79 = sbr.rel (0) target = $region37
    $region36: #{tpu_custom_call.1} parent=1 // pred_region
      %81 = dma.done [#allocation6], 1024
    $region37: #{tpu_custom_call.1} parent=1 // pred_fallthru
      _
    // Predicated region
    $region38: #{tpu_custom_call.1} parent=1 // pred_check
      _
    $region39: #{tpu_custom_call.1} parent=1 // pred_check_branch
      %83 = sbr.rel (0) target = $region41
    $region40: #{tpu_custom_call.1} parent=1 // pred_region
      %85 = dma.done [#allocation6], 1024
    $region41: #{tpu_custom_call.1} parent=1 // pred_fallthru
      _
    // Predicated region
    $region42: #{tpu_custom_call.1} parent=1 // pred_check
      _
    $region43: #{tpu_custom_call.1} parent=1 // pred_check_branch
      %87 = sbr.rel (0) target = $region45
    $region44: #{tpu_custom_call.1} parent=1 // pred_region
      %89 = dma.done [#allocation9], 1024
    $region45: #{tpu_custom_call.1} parent=1 // pred_fallthru
      _
    %v90 = vld [vmem:[#allocation2] sm:$0xf]
    %v91 = vld [vmem:[#allocation2 + $0x4] sm:$0xf]
    %v92 = vld [vmem:[#allocation5] sm:$0xf]
    %v93 = vld [vmem:[#allocation5 + $0x4] sm:$0xf]
    %v94 = vld [vmem:[#allocation5 + $0x8] sm:$0xf]
    %v95 = vld [vmem:[#allocation5 + $0xc] sm:$0xf]
    %v96 = vld [vmem:[#allocation5 + $0x10] sm:$0xf]
    %v97 = vld [vmem:[#allocation5 + $0x14] sm:$0xf]
    %v98 = vld [vmem:[#allocation5 + $0x18] sm:$0xf]
    %v99 = vld [vmem:[#allocation5 + $0x1c] sm:$0xf]
    %v100 = vld [vmem:[#allocation5 + $0x20] sm:$0xf]
    %v101 = vld [vmem:[#allocation5 + $0x24] sm:$0xf]
    %v102 = vld [vmem:[#allocation5 + $0x28] sm:$0xf]
    %v103 = vld [vmem:[#allocation5 + $0x2c] sm:$0xf]
    %v104 = vld [vmem:[#allocation5 + $0x30] sm:$0xf]
    %v105 = vld [vmem:[#allocation5 + $0x34] sm:$0xf]
    %v106 = vld [vmem:[#allocation5 + $0x38] sm:$0xf]
    %v107 = vld [vmem:[#allocation5 + $0x3c] sm:$0xf]
    %v108 = vld [vmem:[%s2] sm:$0x1]
    %v110 = vperm.slane %v108, 0
    %v114 = vunpack.c.l.b16 %v90
    %v115 = vunpack.c.l.b16 %v91
    %v116 = vpack.c.b16 %v115, %v114
    %v134 = vunpack.c.l.b16 %v92
    %v135 = vunpack.c.l.b16 %v93
    %v136 = vunpack.c.l.b16 %v94
    %v137 = vunpack.c.l.b16 %v95
    %v138 = vunpack.c.l.b16 %v96
    %v139 = vunpack.c.l.b16 %v97
    %v140 = vunpack.c.l.b16 %v98
    %v141 = vunpack.c.l.b16 %v99
    %v142 = vunpack.c.l.b16 %v100
    %v143 = vunpack.c.l.b16 %v101
    %v144 = vunpack.c.l.b16 %v102
    %v145 = vunpack.c.l.b16 %v103
    %v146 = vunpack.c.l.b16 %v104
    %v147 = vunpack.c.l.b16 %v105
    %v148 = vunpack.c.l.b16 %v106
    %v149 = vunpack.c.l.b16 %v107
    %v150 = vpack.c.b16 %v135, %v134
    %v151 = vpack.c.b16 %v137, %v136
    %v152 = vpack.c.b16 %v139, %v138
    %v153 = vpack.c.b16 %v141, %v140
    %v154 = vpack.c.b16 %v143, %v142
    %v155 = vpack.c.b16 %v145, %v144
    %v156 = vpack.c.b16 %v147, %v146
    %v157 = vpack.c.b16 %v149, %v148
    %166 = vmatpush.bf16.msra.mxu0 %v157
    %167 = vmatpush.bf16.msra.mxu0 %v156
    %168 = vmatpush.bf16.msra.mxu0 %v155
    %169 = vmatpush.bf16.msra.mxu0 %v154
    %170 = vmatpush.bf16.msra.mxu0 %v153
    %171 = vmatpush.bf16.msra.mxu0 %v152
    %172 = vmatpush.bf16.msra.mxu0 %v151
    %173 = vmatpush.bf16.msra.mxu0 %v150
    %174 = vmatmul.bf16.gmra.mxu0 %v116
    %v175 = vpop.f32.mrf.mxu0
    %v176 = vadd.f32 %v110, %v175
    %v177 = vpop.f32.mrf.mxu0
    %v178 = vadd.f32 %v110, %v177
    %179 = vdwg.mxu0
    %v180 = vmax.f32 %v176, 0.0
    %v181 = vmax.f32 %v178, 0.0
    %v182 = vpack.c.bf16 %v181, %v180
    %v183 = vld [vmem:[#allocation7] sm:$0xf]
    %v184 = vld [vmem:[#allocation7 + $0x4] sm:$0xf]
    %v185 = vld [vmem:[#allocation7 + $0x8] sm:$0xf]
    %v186 = vld [vmem:[#allocation7 + $0xc] sm:$0xf]
    %v187 = vld [vmem:[#allocation7 + $0x10] sm:$0xf]
    %v188 = vld [vmem:[#allocation7 + $0x14] sm:$0xf]
    %v189 = vld [vmem:[#allocation7 + $0x18] sm:$0xf]
    %v190 = vld [vmem:[#allocation7 + $0x1c] sm:$0xf]
    %v191 = vld [vmem:[#allocation7 + $0x20] sm:$0xf]
    %v192 = vld [vmem:[#allocation7 + $0x24] sm:$0xf]
    %v193 = vld [vmem:[#allocation7 + $0x28] sm:$0xf]
    %v194 = vld [vmem:[#allocation7 + $0x2c] sm:$0xf]
    %v195 = vld [vmem:[#allocation7 + $0x30] sm:$0xf]
    %v196 = vld [vmem:[#allocation7 + $0x34] sm:$0xf]
    %v197 = vld [vmem:[#allocation7 + $0x38] sm:$0xf]
    %v198 = vld [vmem:[#allocation7 + $0x3c] sm:$0xf]
    %v199 = vld [vmem:[%s4] sm:$0x1]
    %v201 = vperm.slane %v199, 0
    %v219 = vunpack.c.l.b16 %v183
    %v220 = vunpack.c.l.b16 %v184
    %v221 = vunpack.c.l.b16 %v185
    %v222 = vunpack.c.l.b16 %v186
    %v223 = vunpack.c.l.b16 %v187
    %v224 = vunpack.c.l.b16 %v188
    %v225 = vunpack.c.l.b16 %v189
    %v226 = vunpack.c.l.b16 %v190
    %v227 = vunpack.c.l.b16 %v191
    %v228 = vunpack.c.l.b16 %v192
    %v229 = vunpack.c.l.b16 %v193
    %v230 = vunpack.c.l.b16 %v194
    %v231 = vunpack.c.l.b16 %v195
    %v232 = vunpack.c.l.b16 %v196
    %v233 = vunpack.c.l.b16 %v197
    %v234 = vunpack.c.l.b16 %v198
    %v235 = vpack.c.b16 %v220, %v219
    %v236 = vpack.c.b16 %v222, %v221
    %v237 = vpack.c.b16 %v224, %v223
    %v238 = vpack.c.b16 %v226, %v225
    %v239 = vpack.c.b16 %v228, %v227
    %v240 = vpack.c.b16 %v230, %v229
    %v241 = vpack.c.b16 %v232, %v231
    %v242 = vpack.c.b16 %v234, %v233
    %251 = vmatpush.bf16.msra.mxu0 %v242
    %252 = vmatpush.bf16.msra.mxu0 %v241
    %253 = vmatpush.bf16.msra.mxu0 %v240
    %254 = vmatpush.bf16.msra.mxu0 %v239
    %255 = vmatpush.bf16.msra.mxu0 %v238
    %256 = vmatpush.bf16.msra.mxu0 %v237
    %257 = vmatpush.bf16.msra.mxu0 %v236
    %258 = vmatpush.bf16.msra.mxu0 %v235
    %259 = vmatmul.bf16.gmra.mxu0 %v182
    %v260 = vpop.f32.mrf.mxu0
    %v261 = vadd.f32 %v201, %v260
    %v262 = vpop.f32.mrf.mxu0
    %v263 = vadd.f32 %v201, %v262
    %264 = vdwg.mxu0
    %v265 = vmax.f32 %v261, 0.0
    %v266 = vmax.f32 %v263, 0.0
    %v267 = vpack.c.bf16 %v266, %v265
    %v268 = vld [vmem:[#allocation8] sm:$0xf]
    %v269 = vld [vmem:[#allocation8 + $0x4] sm:$0xf]
    %v270 = vld [vmem:[#allocation8 + $0x8] sm:$0xf]
    %v271 = vld [vmem:[#allocation8 + $0xc] sm:$0xf]
    %v272 = vld [vmem:[#allocation8 + $0x10] sm:$0xf]
    %v273 = vld [vmem:[#allocation8 + $0x14] sm:$0xf]
    %v274 = vld [vmem:[#allocation8 + $0x18] sm:$0xf]
    %v275 = vld [vmem:[#allocation8 + $0x1c] sm:$0xf]
    %v276 = vld [vmem:[#allocation8 + $0x20] sm:$0xf]
    %v277 = vld [vmem:[#allocation8 + $0x24] sm:$0xf]
    %v278 = vld [vmem:[#allocation8 + $0x28] sm:$0xf]
    %v279 = vld [vmem:[#allocation8 + $0x2c] sm:$0xf]
    %v280 = vld [vmem:[#allocation8 + $0x30] sm:$0xf]
    %v281 = vld [vmem:[#allocation8 + $0x34] sm:$0xf]
    %v282 = vld [vmem:[#allocation8 + $0x38] sm:$0xf]
    %v283 = vld [vmem:[#allocation8 + $0x3c] sm:$0xf]
    %v284 = vld [vmem:[%s6] sm:$0x1]
    %v286 = vperm.slane %v284, 0
    %v304 = vunpack.c.l.b16 %v268
    %v305 = vunpack.c.l.b16 %v269
    %v306 = vunpack.c.l.b16 %v270
    %v307 = vunpack.c.l.b16 %v271
    %v308 = vunpack.c.l.b16 %v272
    %v309 = vunpack.c.l.b16 %v273
    %v310 = vunpack.c.l.b16 %v274
    %v311 = vunpack.c.l.b16 %v275
    %v312 = vunpack.c.l.b16 %v276
    %v313 = vunpack.c.l.b16 %v277
    %v314 = vunpack.c.l.b16 %v278
    %v315 = vunpack.c.l.b16 %v279
    %v316 = vunpack.c.l.b16 %v280
    %v317 = vunpack.c.l.b16 %v281
    %v318 = vunpack.c.l.b16 %v282
    %v319 = vunpack.c.l.b16 %v283
    %v320 = vpack.c.b16 %v305, %v304
    %v321 = vpack.c.b16 %v307, %v306
    %v322 = vpack.c.b16 %v309, %v308
    %v323 = vpack.c.b16 %v311, %v310
    %v324 = vpack.c.b16 %v313, %v312
    %v325 = vpack.c.b16 %v315, %v314
    %v326 = vpack.c.b16 %v317, %v316
    %v327 = vpack.c.b16 %v319, %v318
    %336 = vmatpush.bf16.msra.mxu0 %v327
    %337 = vmatpush.bf16.msra.mxu0 %v326
    %338 = vmatpush.bf16.msra.mxu0 %v325
    %339 = vmatpush.bf16.msra.mxu0 %v324
    %340 = vmatpush.bf16.msra.mxu0 %v323
    %341 = vmatpush.bf16.msra.mxu0 %v322
    %342 = vmatpush.bf16.msra.mxu0 %v321
    %343 = vmatpush.bf16.msra.mxu0 %v320
    %344 = vmatmul.bf16.gmra.mxu0 %v267
    %v345 = vpop.f32.mrf.mxu0
    %v346 = vadd.f32 %v286, %v345
    %v347 = vpop.f32.mrf.mxu0
    %v348 = vadd.f32 %v286, %v347
    %349 = vdwg.mxu0
    %350 = vst [vmem:[#allocation10] sm:$0xff] %v346
    %351 = vst [vmem:[#allocation10 + $0x8] sm:$0xff] %v348
    // Predicated region
    $region46: #{tpu_custom_call.1} parent=1 // pred_check
      _
    $region47: #{tpu_custom_call.1} parent=1 // pred_check_branch
      %353 = sbr.rel (0) target = $region49
    $region48: #{tpu_custom_call.1} parent=1 // pred_region
      %355 = vsyncadd [#allocation4], 0
      %s356 = sshll.u32 [#allocation10], 4
      %s357 = int_to_ptr.vmem [resolvable:$true] %s356
      %s358 = sshll.u32 %s7, 4
      %s359 = int_to_ptr.hbm [resolvable:$true] %s358
      %364 = dma.vmem_to_hbm [thread:$0]  %s357, 256, %s359, [#allocation4], 128, 128, 8
    $region49: #{tpu_custom_call.1} parent=1 // pred_fallthru
      _
    // Predicated region
    $region50: #{tpu_custom_call.1} parent=1 // pred_check
      _
    $region51: #{tpu_custom_call.1} parent=1 // pred_check_branch
      %366 = sbr.rel (0) target = $region53
    $region52: #{tpu_custom_call.1} parent=1 // pred_region
      %368 = dma.done [#allocation4], 256
    $region53: #{tpu_custom_call.1} parent=1 // pred_fallthru
      _
    %369 = vsyncpa [#allocation3], 1
    %370 = vsyncpa [#allocation6], 1
    %371 = vsyncpa [#allocation9], 1
    %372 = vsyncpa [#allocation4], 1

</llo_original>
